<compile_context>
chip_gen: v7x
topology: tpu7x:2x2x1
jax: 0.10.0
libtpu: 0.0.40
codegen_flags: <defaults>
</compile_context>

<pallas_src>
import jax
import jax.numpy as jnp
from jax.experimental import pallas as pl
from jax.experimental.pallas import tpu as pltpu

_LANES = 128      # vreg lane width
_SUBLANES = 8     # f32 sublane count


def _round_up(x, m):
    return ((x + m - 1) // m) * m


# --------------------------------------------------------------------------- #
# Kernels
# --------------------------------------------------------------------------- #
def _affine_scalar_kernel(x_ref, scale_ref, bias_ref, o_ref):
    """Lane-dense elementwise affine: o = x * scale + bias.

    x_ref / o_ref : (TILE_ROWS, 128) slab whose entries are batch samples
                    (batch on the lane axis -> full vregs, unmasked vst).
    scale_ref / bias_ref : (1,) f32 scalars in SMEM (splat from sreg).
    """
    o_ref[...] = x_ref[...] * scale_ref[0] + bias_ref[0]


def _affine_matmul_kernel(x_ref, w_ref, b_ref, o_ref):
    """General fused affine tile (MXU path): o = x @ W_fused + b_fused."""
    y = jnp.dot(x_ref[...], w_ref[...], preferred_element_type=jnp.float32)
    o_ref[...] = (y + b_ref[...]).astype(o_ref.dtype)


# --------------------------------------------------------------------------- #
# Parameter fusion (hoisted out of the per-call forward path)
# --------------------------------------------------------------------------- #
def fuse_simplenet_params(w1, b1, w2, b2):
    """linear2(linear1(x)) == x @ (W1 @ W2) + (b1 @ W2 + b2).

    With no activation between the layers the two Linears collapse into one
    affine map. Call this ONCE whenever the weights change; it is not part of
    the per-call forward path.
    """
    w_fused = (w1 @ w2).astype(jnp.float32)        # (in_features, out_features)
    b_fused = (b1 @ w2 + b2).astype(jnp.float32)   # (1, out_features)
    return w_fused, b_fused


# --------------------------------------------------------------------------- #
# Forward
# --------------------------------------------------------------------------- #
def _scalar_affine_forward(x, scale, bias, block_rows):
    """in_features == out_features == 1 fast path: y[i] = x[i] * scale + bias."""
    n = x.shape[0]

    # Lane-dense batch slab: batch -> (rows, 128), 128 samples per sublane row.
    rows = _round_up(pl.cdiv(n, _LANES), _SUBLANES)
    tile_rows = min(block_rows, rows)
    # Keep >= 2 parallel grid steps when there is enough work (v7x: 2 TensorCores).
    if rows >= 2 * _SUBLANES:
        tile_rows = min(tile_rows,
                        max(_SUBLANES, (rows // 2) // _SUBLANES * _SUBLANES))
    rows_pad = pl.cdiv(rows, tile_rows) * tile_rows
    n_pad = rows_pad * _LANES

    x_flat = x.reshape(-1).astype(jnp.float32)
    if n_pad != n:
        # Only the ragged tail is padded; a no-op when n is already slab-aligned.
        x_flat = jnp.pad(x_flat, (0, n_pad - n))
    x2d = x_flat.reshape(rows_pad, _LANES)

    grid = (rows_pad // tile_rows,)
    y2d = pl.pallas_call(
        _affine_scalar_kernel,
        out_shape=jax.ShapeDtypeStruct((rows_pad, _LANES), jnp.float32),
        grid=grid,
        in_specs=[
            pl.BlockSpec((tile_rows, _LANES), lambda i: (i, 0)),   # x slab tile
            pl.BlockSpec(memory_space=pltpu.MemorySpace.SMEM),     # fused scale
            pl.BlockSpec(memory_space=pltpu.MemorySpace.SMEM),     # fused bias
        ],
        out_specs=pl.BlockSpec((tile_rows, _LANES), lambda i: (i, 0)),
        compiler_params=pltpu.CompilerParams(
            dimension_semantics=("parallel",)),
        cost_estimate=pl.CostEstimate(
            flops=2 * n, transcendentals=0, bytes_accessed=8 * n + 8),
    )(x2d, scale, bias)

    return y2d.reshape(-1)[:n].reshape(n, 1)


def _matmul_affine_forward(x, w_fused, b_fused, block_rows):
    """General path: y = x @ W_fused + b_fused on the MXU, batch-only grid."""
    n, in_f = x.shape
    out_f = w_fused.shape[1]

    # Lane-align the output-feature axis only when it is not already aligned.
    out_pad = _round_up(out_f, _LANES)
    if out_pad != out_f:
        w_p = jnp.zeros((in_f, out_pad), jnp.float32).at[:, :out_f].set(w_fused)
        b_p = jnp.zeros((1, out_pad), jnp.float32).at[:, :out_f].set(b_fused)
    else:
        w_p, b_p = w_fused, b_fused

    n8 = _round_up(n, _SUBLANES)
    tm = min(block_rows, n8)
    if n8 >= 2 * _SUBLANES:                       # >= 2 parallel steps for v7x
        tm = min(tm, max(_SUBLANES, (n8 // 2) // _SUBLANES * _SUBLANES))
    # VMEM footprint: resident (in_f, out_pad) weights + double-buffered x / out
    # tiles; fits the 32 MiB scoped default on v5e / v6e / v7x for SimpleNet-sized
    # feature dims. Lower block_rows or tile out_f if that ever changes.
    n_pad = pl.cdiv(n8, tm) * tm
    x_p = x.astype(jnp.float32)
    if n_pad != n:
        x_p = jnp.zeros((n_pad, in_f), jnp.float32).at[:n, :].set(x_p)

    grid = (n_pad // tm,)
    y_pad = pl.pallas_call(
        _affine_matmul_kernel,
        out_shape=jax.ShapeDtypeStruct((n_pad, out_pad), jnp.float32),
        grid=grid,
        in_specs=[
            pl.BlockSpec((tm, in_f), lambda i: (i, 0)),       # x: tiled over batch
            pl.BlockSpec((in_f, out_pad), lambda i: (0, 0)),  # fused W: VMEM-resident
            pl.BlockSpec((1, out_pad), lambda i: (0, 0)),     # fused b: VMEM-resident
        ],
        out_specs=pl.BlockSpec((tm, out_pad), lambda i: (i, 0)),
        compiler_params=pltpu.CompilerParams(
            dimension_semantics=("parallel",)),
        cost_estimate=pl.CostEstimate(
            flops=2 * n * in_f * out_f, transcendentals=0,
            bytes_accessed=4 * (n * in_f + in_f * out_f + out_f + n * out_f)),
    )(x_p, w_p, b_p)

    return y_pad[:n, :out_f]


def simplenet_forward(x, w_fused, b_fused, *, block_rows=512):
    """Forward pass of SimpleNet given pre-fused parameters.

    x: (N, in_features); w_fused: (in_features, out_features); b_fused: (1, out_features).
    """
    in_f = x.shape[1]
    out_f = w_fused.shape[1]
    if in_f == 1 and out_f == 1:
        return _scalar_affine_forward(
            x, w_fused.reshape(1), b_fused.reshape(1), block_rows)
    return _matmul_affine_forward(x, w_fused, b_fused, block_rows)


# --------------------------------------------------------------------------- #
# Init helpers / demo
# --------------------------------------------------------------------------- #
def init_linear_params(key, in_features, out_features):
    """torch.nn.Linear-style init (uniform +/- 1/sqrt(fan_in)); weight stored (in, out)."""
    kw, kb = jax.random.split(key)
    bound = 1.0 / jnp.sqrt(jnp.float32(in_features))
    w = jax.random.uniform(kw, (in_features, out_features), jnp.float32, -bound, bound)
    b = jax.random.uniform(kb, (1, out_features), jnp.float32, -bound, bound)
    return w, b


if __name__ == "__main__":
    key = jax.random.PRNGKey(0)
    k1, k2, k3, k4, k5 = jax.random.split(key, 5)

    # --- The module's actual config: scalar-in / scalar-out regression MLP. ---
    total_number = 500
    in_features, hidden, out_features = 1, 32, 1
    x = jnp.linspace(-2.0 * jnp.pi, 2.0 * jnp.pi, total_number,
                     dtype=jnp.float32).reshape(total_number, in_features)
    w1, b1 = init_linear_params(k1, in_features, hidden)
    w2, b2 = init_linear_params(k2, hidden, out_features)
    w_fused, b_fused = fuse_simplenet_params(w1, b1, w2, b2)   # hoisted, once

    y = simplenet_forward(x, w_fused, b_fused)
    jax.block_until_ready(y)
    y_ref = (x @ w1 + b1) @ w2 + b2                            # un-fused reference
    assert y.shape == (total_number, out_features)
    assert jnp.allclose(y, y_ref, atol=1e-5, rtol=1e-5)

    # --- General (in_features > 1) MXU path smoke test. ---
    n2, in2, hid2, out2 = 64, 8, 32, 16
    x2 = jax.random.normal(k3, (n2, in2), jnp.float32)
    w1b, b1b = init_linear_params(k4, in2, hid2)
    w2b, b2b = init_linear_params(k5, hid2, out2)
    wf2, bf2 = fuse_simplenet_params(w1b, b1b, w2b, b2b)
    y2 = simplenet_forward(x2, wf2, bf2)
    jax.block_until_ready(y2)
    y2_ref = (x2 @ w1b + b1b) @ w2b + b2b
    assert y2.shape == (n2, out2)
    assert jnp.allclose(y2, y2_ref, atol=1e-5, rtol=1e-5)

    print("KERNEL_OK")
</pallas_src>

<mosaic_0001>
module attributes {stable_mosaic.version = 11 : i64} {
  func.func @_affine_scalar_kernel(%arg0: i32, %arg1: memref<8x128xf32, #tpu.memory_space<vmem>>, %arg2: memref<1xf32, #tpu.memory_space<smem>>, %arg3: memref<1xf32, #tpu.memory_space<smem>>, %arg4: memref<8x128xf32, #tpu.memory_space<vmem>>) attributes {dimension_semantics = [#tpu.dimension_semantics<parallel>], iteration_bounds = array<i64: 1>, scalar_prefetch = 0 : i64, scratch_operands = 0 : i64, tpu.core_type = #tpu.core_type<tc>, window_params = [{transform_indices = @transform_0, window_bounds = array<i64: 8, 128>}, {transform_indices = @transform_1, window_bounds = array<i64: 1>}, {transform_indices = @transform_2, window_bounds = array<i64: 1>}, {transform_indices = @transform_3, window_bounds = array<i64: 8, 128>}]} {
    %c0 = arith.constant 0 : index
    %c0_0 = arith.constant 0 : index
    %0 = vector.load %arg1[%c0, %c0_0] : memref<8x128xf32, #tpu.memory_space<vmem>>, vector<8x128xf32>
    %c0_1 = arith.constant 0 : index
    %1 = memref.load %arg2[%c0_1] : memref<1xf32, #tpu.memory_space<smem>>
    %2 = vector.broadcast %1 : f32 to vector<8x128xf32>
    %3 = arith.mulf %0, %2 : vector<8x128xf32>
    %c0_2 = arith.constant 0 : index
    %4 = memref.load %arg3[%c0_2] : memref<1xf32, #tpu.memory_space<smem>>
    %5 = vector.broadcast %4 : f32 to vector<8x128xf32>
    %6 = arith.addf %3, %5 : vector<8x128xf32>
    %c0_3 = arith.constant 0 : index
    %c0_4 = arith.constant 0 : index
    %7 = vector.load %arg4[%c0_3, %c0_4] : memref<8x128xf32, #tpu.memory_space<vmem>>, vector<8x128xf32>
    tpu.vector_store %arg4[%c0_3, %c0_4], %6 {strides = array<i32>} : memref<8x128xf32, #tpu.memory_space<vmem>>, vector<8x128xf32>,
    return
  }
  func.func @transform_0(%arg0: i32) -> (i32, i32) {
    %c0_i32 = arith.constant 0 : i32
    %c0_i32_0 = arith.constant 0 : i32
    return %arg0, %c0_i32 : i32, i32
  }
  func.func @transform_1(%arg0: i32) -> i32 {
    %c0_i32 = arith.constant 0 : i32
    %c0_i32_0 = arith.constant 0 : i32
    return %c0_i32 : i32
  }
  func.func @transform_2(%arg0: i32) -> i32 {
    %c0_i32 = arith.constant 0 : i32
    %c0_i32_0 = arith.constant 0 : i32
    return %c0_i32 : i32
  }
  func.func @transform_3(%arg0: i32) -> (i32, i32) {
    %c0_i32 = arith.constant 0 : i32
    %c0_i32_0 = arith.constant 0 : i32
    return %arg0, %c0_i32 : i32, i32
  }
}

</mosaic_0001>

<llo_original>
// kernel: tpu_custom_call.1
$region0: #{tpu_custom_call.1}
  #allocation0 [shape = 'u32[]', space=smem, size = 0x4, offset = 0x4, fixed_abs, tag = 'smem constant byte address 0x4 - core index']
  #allocation1 [shape = 'u32[144,128]{1,0:T(1,128)}', space=vmem, size = 0x12000, scoped, tag = 'internal scratch']
  #allocation2 [shape = 'f32[1]{0:T(128)S(6)}', space=smem, size = 0x200, scoped, tag = 'scoped memory for tpu_custom_call.1']
  #allocation3 [shape = 'f32[1]{0:T(128)S(6)}', space=smem, size = 0x200, scoped, tag = 'scoped memory for tpu_custom_call.1']
  %s0 = inlined_call_operand.hbm [shape: f32[8,128], index: 0, kind: input, shape index: {}]
  %s1 = inlined_call_operand.<no memory space> [shape: f32[1], index: 1, kind: input, shape index: {}]
  %s2 = inlined_call_operand.<no memory space> [shape: f32[1], index: 2, kind: input, shape index: {}]
  %s3 = inlined_call_operand.hbm [shape: f32[8,128], index: 3, kind: output, shape index: {}]
  %s4 = sld [smem:[#allocation0]]
  $region26: #{tpu_custom_call.1} parent=0
    _
  %s6 = ssub.s32 1, %s4
  %s7 = scalar_select 0, %s6, %s4
  %8 = sst [smem:[#allocation2]] %s1
  %9 = sst [smem:[#allocation3]] %s2
  $region1: #{tpu_custom_call.1} parent=0
    #allocation4 [shape = 'u8[4096]{0}', space=vmem, size = 0x1000, scoped, tag = 'input window, operand 0, single buffered']
    #allocation5 [shape = 's32[1]{0}', space=sflag, size = 0x4, scoped, tag = 'scoped memory for tpu_custom_call.1']
    #allocation6 [shape = 's32[1]{0}', space=sflag, size = 0x4, scoped, tag = 'scoped memory for tpu_custom_call.1']
    #allocation7 [shape = 'u8[4096]{0}', space=vmem, size = 0x1000, scoped, tag = 'output window, operand 0, single buffered']
    %10 = vsyncpa [#allocation5], 0
    %11 = vsyncpa [#allocation6], 0
    // Predicated region
    $region2: #{tpu_custom_call.1} parent=1 // pred_check
      _
    $region3: #{tpu_custom_call.1} parent=1 // pred_check_branch
      %13 = sbr.rel (0) target = $region5
    $region4: #{tpu_custom_call.1} parent=1 // pred_region
      %s15 = ssub.s32 128, 128
      %16 = vsyncadd [#allocation5], %s15
      %s18 = sshll.u32 [#allocation4], 4
      %s19 = int_to_ptr.vmem [resolvable:$true] %s18
      %21 = dma.hbm_to_vmem [thread:$0]  %s0, 128, %s19, [#allocation5]
    $region5: #{tpu_custom_call.1} parent=1 // pred_fallthru
      _
    // Predicated region
    $region6: #{tpu_custom_call.1} parent=1 // pred_check
      _
    $region7: #{tpu_custom_call.1} parent=1 // pred_check_branch
      %23 = sbr.rel (0) target = $region9
    $region8: #{tpu_custom_call.1} parent=1 // pred_region
      _
    $region9: #{tpu_custom_call.1} parent=1 // pred_fallthru
      _
    // Predicated region
    $region10: #{tpu_custom_call.1} parent=1 // pred_check
      _
    $region11: #{tpu_custom_call.1} parent=1 // pred_check_branch
      %25 = sbr.rel (0) target = $region13
    $region12: #{tpu_custom_call.1} parent=1 // pred_region
      _
    $region13: #{tpu_custom_call.1} parent=1 // pred_fallthru
      _
    // Predicated region
    $region14: #{tpu_custom_call.1} parent=1 // pred_check
      _
    $region15: #{tpu_custom_call.1} parent=1 // pred_check_branch
      %27 = sbr.rel (0) target = $region17
    $region16: #{tpu_custom_call.1} parent=1 // pred_region
      %28 = dma.done [#allocation5], 128
    $region17: #{tpu_custom_call.1} parent=1 // pred_fallthru
      _
    %v29 = vld [vmem:[#allocation4] sm:$0xff]
    %s30 = sld [smem:[#allocation2]]
    %v31 = vstv %s30
    %v32 = vmul.f32 %v29, %v31
    %s33 = sld [smem:[#allocation3]]
    %v34 = vstv %s33
    %v35 = vadd.f32 %v32, %v34
    %36 = vst [vmem:[#allocation7] sm:$0xff] %v35
    // Predicated region
    $region18: #{tpu_custom_call.1} parent=1 // pred_check
      _
    $region19: #{tpu_custom_call.1} parent=1 // pred_check_branch
      %38 = sbr.rel (0) target = $region21
    $region20: #{tpu_custom_call.1} parent=1 // pred_region
      %s40 = ssub.s32 128, 128
      %41 = vsyncadd [#allocation6], %s40
      %s43 = sshll.u32 [#allocation7], 4
      %s44 = int_to_ptr.vmem [resolvable:$true] %s43
      %46 = dma.vmem_to_hbm [thread:$0]  %s44, 128, %s3, [#allocation6]
    $region21: #{tpu_custom_call.1} parent=1 // pred_fallthru
      _
    // Predicated region
    $region22: #{tpu_custom_call.1} parent=1 // pred_check
      _
    $region23: #{tpu_custom_call.1} parent=1 // pred_check_branch
      %48 = sbr.rel (0) target = $region25
    $region24: #{tpu_custom_call.1} parent=1 // pred_region
      %49 = dma.done [#allocation6], 128
    $region25: #{tpu_custom_call.1} parent=1 // pred_fallthru
      _
    %50 = vsyncpa [#allocation5], 1
    %51 = vsyncpa [#allocation6], 1

</llo_original>
